<compile_context>
chip_gen: v6e
topology: v6e:2x2x1
jax: 0.10.0
libtpu: 0.0.40
codegen_flags: <defaults>
</compile_context>

<pallas_src>
from typing import NamedTuple

import numpy as np
import jax
import jax.numpy as jnp
from jax import lax
from jax.experimental import pallas as pl
from jax.experimental.pallas import tpu as pltpu


# ---------------------------------------------------------------------------
# Tunables / budgets
# ---------------------------------------------------------------------------
_MAX_BATCH_TILE = 2048   # 1024-2048 row tiles reach ~86% of HBM roofline
_MIN_BATCH_TILE = 128
_GRIDLESS_MAX_B = 1024   # above this, tile the batch (>= 2 steps for v7x)
_TINY_B = 256            # below this, use the trivially-safe VPU path (O == 1)


def _cdiv(a, b):
    return -(-a // b)


def _round_up(a, m):
    return _cdiv(a, m) * m


def _round_down(a, m):
    return (a // m) * m


def _vmem_budget_bytes():
    """VMEM the kernel may use, derived from the chip when queryable.

    v5e/v6e have 128 MiB VMEM per TensorCore, v7x only 64 MiB, while the
    *default scoped* limits are much lower (16/32/32 MiB), so we size tiles
    against an explicit budget and also pass it as vmem_limit_bytes.
    48 MiB is safe on every listed generation (<= 3/4 of v7x's 64 MiB).
    """
    try:
        cap = int(pltpu.get_tpu_info().vmem_capacity_bytes)
    except Exception:
        cap = 64 * 1024 * 1024          # conservative: v7x per-core VMEM
    return min((cap * 3) // 4, 48 * 1024 * 1024)


def _balanced_batch_tiles(B, tb_cap, multiple):
    """Batch tile (multiple of `multiple`, <= tb_cap) giving >= 2 roughly even
    grid steps, so v7x's two TensorCores get balanced work."""
    tb_cap = max(multiple, _round_down(tb_cap, multiple))
    nb = max(2, _cdiv(B, tb_cap))
    if nb % 2:
        nb += 1
    tb = min(tb_cap, _round_up(_cdiv(B, nb), multiple))
    return tb, _cdiv(B, tb)


# ---------------------------------------------------------------------------
# Kernels
# ---------------------------------------------------------------------------
def _o1_vpu_kernel(x_ref, w_ref, b_ref, o_ref):
    """O == 1, tiny batch: pure VPU multiply + lane reduce.
    x:(B,D) VMEM  w:(1,D) VMEM  b:(1,1) SMEM  o:(B,1) VMEM."""
    x = x_ref[...].astype(jnp.float32)
    w = w_ref[...].astype(jnp.float32)
    s = jnp.sum(x * w, axis=-1, keepdims=True)                 # (B, 1)
    o_ref[...] = (s + b_ref[0, 0]).astype(o_ref.dtype)


def _o1_lanedense_kernel(x_ref, w_ref, b_ref, o_ref):
    """O == 1, large batch: result produced directly in a lane-dense (1, TB)
    layout (one dot pass over x; dense lane stores instead of TB/8 masked
    single-lane stores).
    x:(TB,D) VMEM  w:(1,D) VMEM  b:(1,1) SMEM  o:(1,TB) VMEM."""
    yt = lax.dot_general(
        w_ref[...], x_ref[...],
        dimension_numbers=(((1,), (1,)), ((), ())),            # contract both D axes
        preferred_element_type=jnp.float32)                    # (1, TB)
    o_ref[...] = (yt + b_ref[0, 0]).astype(o_ref.dtype)


def _mxu_kernel(x_ref, w_ref, b_ref, o_ref):
    """General path (O >= 2): y = x @ W_t + b with W pre-transposed to (D, O).
    x:(TB,D)  w:(D,TO)  b:(1,TO)  o:(TB,TO), all VMEM."""
    y = jnp.dot(x_ref[...], w_ref[...], preferred_element_type=jnp.float32)
    o_ref[...] = (y + b_ref[...]).astype(o_ref.dtype)


# ---------------------------------------------------------------------------
# Parameters
# ---------------------------------------------------------------------------
class PreparedParams(NamedTuple):
    w: jax.Array          # (1, D) if output_size == 1 else (D, O) pre-transposed
    b: jax.Array          # (1, O) float32
    output_size: int


def init_params(seed, input_size, output_size=1):
    """Mirror LogisticRegModel._initialize_weights: kaiming_normal_ with
    nonlinearity='linear' -> std = 1/sqrt(fan_in); bias = 0.
    # TODO(synk): statistically equivalent, not bit-identical to the
    # torch.Generator-seeded kaiming_normal_ draw.
    """
    key = jax.random.PRNGKey(seed)
    std = 1.0 / float(np.sqrt(input_size))
    weight = jax.random.normal(key, (output_size, input_size), jnp.float32) * std
    bias = jnp.zeros((output_size,), jnp.float32)
    return weight, bias


def prepare_params(weight, bias, compute_dtype=jnp.float32):
    """One-time layout plumbing, hoisted out of the forward pass.

    weight: (O, D) PyTorch nn.Linear layout, bias: (O,).  Use
    compute_dtype=jnp.bfloat16 (with bf16 x) to halve streamed bytes; the
    kernels always accumulate in f32.
    """
    O, D = weight.shape
    w = jnp.asarray(weight, compute_dtype)
    w = w.reshape(1, D) if O == 1 else w.T                      # (1,D) / (D,O)
    b = jnp.asarray(bias, jnp.float32).reshape(1, O)
    return PreparedParams(w=w, b=b, output_size=O)


# ---------------------------------------------------------------------------
# Forward
# ---------------------------------------------------------------------------
def _forward_o1(x, w_row, b, budget):
    B, D = x.shape
    in_bytes = x.dtype.itemsize
    out_shape_t = jax.ShapeDtypeStruct((1, B), jnp.float32)     # lane-dense view

    if B <= _TINY_B:
        # Tiny batch: gridless VPU path, everything resident, output (B, 1).
        return pl.pallas_call(
            _o1_vpu_kernel,
            out_shape=jax.ShapeDtypeStruct((B, 1), jnp.float32),
            in_specs=[
                pl.BlockSpec(memory_space=pltpu.MemorySpace.VMEM),
                pl.BlockSpec(memory_space=pltpu.MemorySpace.VMEM),
                pl.BlockSpec(memory_space=pltpu.MemorySpace.SMEM),
            ],
            out_specs=pl.BlockSpec(memory_space=pltpu.MemorySpace.VMEM),
        )(x, w_row, b)

    resident = 2 * D * in_bytes                  # (1, D) weight row (x2: headroom)
    row_bytes = D * in_bytes + 4                 # one x row + one f32 output value

    if B <= _GRIDLESS_MAX_B and resident + B * row_bytes <= budget:
        out_t = pl.pallas_call(
            _o1_lanedense_kernel,
            out_shape=out_shape_t,
            in_specs=[
                pl.BlockSpec(memory_space=pltpu.MemorySpace.VMEM),
                pl.BlockSpec(memory_space=pltpu.MemorySpace.VMEM),
                pl.BlockSpec(memory_space=pltpu.MemorySpace.SMEM),
            ],
            out_specs=pl.BlockSpec(memory_space=pltpu.MemorySpace.VMEM),
        )(x, w_row, b)
        return out_t.reshape(B, 1)

    # Batch-tiled streaming path: tile size derived from VMEM budget
    # (double-buffered x + out blocks), >= 2 even-ish steps for v7x megacore.
    tb_fit = (budget - resident) // (2 * row_bytes)
    tb_cap = max(_MIN_BATCH_TILE, min(_MAX_BATCH_TILE, _round_down(tb_fit, 128)))
    tb, nb = _balanced_batch_tiles(B, tb_cap, 128)   # 128-multiple: lane-dense out block
    # TODO(synk): for extreme D (> ~40k f32 features) add a D-reduction grid
    # axis with an f32 VMEM accumulator instead of shrinking to a 128-row tile.

    out_t = pl.pallas_call(
        _o1_lanedense_kernel,
        out_shape=out_shape_t,
        grid=(nb,),
        in_specs=[
            pl.BlockSpec((tb, D), lambda i: (i, 0)),              # streamed x
            pl.BlockSpec((1, D), lambda i: (0, 0)),               # resident weight row
            pl.BlockSpec(memory_space=pltpu.MemorySpace.SMEM),    # scalar bias
        ],
        out_specs=pl.BlockSpec((1, tb), lambda i: (0, i)),        # lane-dense stores
        compiler_params=pltpu.CompilerParams(
            dimension_semantics=("parallel",),
            vmem_limit_bytes=budget),
    )(x, w_row, b)
    return out_t.reshape(B, 1)


def _forward_mxu(x, w_t, b, O, budget, o_tile=None):
    B, D = x.shape
    in_bytes = x.dtype.itemsize
    w_bytes = w_t.dtype.itemsize
    out_shape = jax.ShapeDtypeStruct((B, O), jnp.float32)

    total_resident = D * O * w_bytes + B * (D * in_bytes + O * 4) + O * 4
    if B <= _GRIDLESS_MAX_B and total_resident <= budget:
        return pl.pallas_call(
            _mxu_kernel,
            out_shape=out_shape,
            in_specs=[
                pl.BlockSpec(memory_space=pltpu.MemorySpace.VMEM),
                pl.BlockSpec(memory_space=pltpu.MemorySpace.VMEM),
                pl.BlockSpec(memory_space=pltpu.MemorySpace.VMEM),
            ],
            out_specs=pl.BlockSpec(memory_space=pltpu.MemorySpace.VMEM),
        )(x, w_t, b)

    # Output-feature tile: keep the resident weight block under ~1/3 of the
    # budget (a weight that fits v5e/v6e's 128 MiB can blow v7x's 64 MiB).
    w_budget = budget // 3
    if o_tile is None:
        if D * O * w_bytes <= w_budget:
            to = O                               # whole weight resident
        else:
            to = 256                             # 256-multiples keep v6e/v7x 2x256^2 MXU fed
            while D * to * w_bytes > w_budget and to > 128:
                to //= 2
            # TODO(synk): if even a (D, 128) weight block does not fit, add a
            # D-reduction grid axis with an f32 VMEM accumulator ("arbitrary").
    else:
        to = int(o_tile)
    if to < O:
        to = max(128, _round_down(to, 128))      # tiled O blocks must be lane-aligned
    else:
        to = O
    no = _cdiv(O, to)

    # Batch tile from the remaining budget (x + out blocks double-buffered).
    row_bytes = D * in_bytes + to * 4
    avail = max(budget - 2 * D * to * w_bytes, 2 * row_bytes * 8)
    tb_fit = avail // (2 * row_bytes)
    tb_cap = max(8, min(_MAX_BATCH_TILE, _round_down(tb_fit, 8)))
    tb, nb = _balanced_batch_tiles(B, tb_cap, 8)

    return pl.pallas_call(
        _mxu_kernel,
        out_shape=out_shape,
        grid=(nb, no),                                      # j (out features) fastest
        in_specs=[
            pl.BlockSpec((tb, D), lambda i, j: (i, 0)),     # x: fetched once per i
            pl.BlockSpec((D, to), lambda i, j: (0, j)),     # weight column block
            pl.BlockSpec((1, to), lambda i, j: (0, j)),     # bias block
        ],
        out_specs=pl.BlockSpec((tb, to), lambda i, j: (i, j)),
        # TODO(synk): for 2 <= O < 128 the out block is lane-masked; pack the
        # output into a (TB*O/128, 128) slab once Mosaic reshape cost is vetted.
        compiler_params=pltpu.CompilerParams(
            dimension_semantics=("parallel", "arbitrary"),
            vmem_limit_bytes=budget),
    )(x, w_t, b)


def logistic_reg_forward(x, params, *, o_tile=None):
    """x: (B, D) -> (B, O) float32.  Equivalent to nn.Linear(D, O)(x)."""
    B, D = x.shape
    O = params.output_size
    w = params.w.astype(x.dtype)     # tiny cast; keeps in-kernel dots single-dtype
    b = params.b                     # (1, O) f32
    budget = _vmem_budget_bytes()
    if O == 1:
        return _forward_o1(x, w, b, budget)
    return _forward_mxu(x, w, b, O, budget, o_tile)


def logistic_reg_apply(x, weight, bias):
    """Convenience drop-in matching the PyTorch module signature."""
    return logistic_reg_forward(x, prepare_params(weight, bias))


# ---------------------------------------------------------------------------
# Self-test
# ---------------------------------------------------------------------------
if __name__ == "__main__":
    def check(B, D, O, tol, o_tile=None):
        weight, _ = init_params(seed=0, input_size=D, output_size=O)
        bias = jax.random.normal(jax.random.PRNGKey(1), (O,), jnp.float32) * 0.1
        params = prepare_params(weight, bias)
        x = jax.random.normal(jax.random.PRNGKey(0), (B, D), jnp.float32)

        y = jax.block_until_ready(logistic_reg_forward(x, params, o_tile=o_tile))

        y_ref = (np.asarray(x, np.float64) @ np.asarray(weight, np.float64).T
                 + np.asarray(bias, np.float64))
        assert y.shape == (B, O), (y.shape, (B, O))
        np.testing.assert_allclose(np.asarray(y), y_ref, rtol=tol, atol=tol)

    # Required small config (module defaults: output_size=1) -> gridless VPU path.
    check(B=8, D=32, O=1, tol=1e-4)
    # Batch-tiled, lane-dense O == 1 path (partial last batch tile).
    check(B=2600, D=128, O=1, tol=5e-3)
    # Gridless MXU path (O >= 2).
    check(B=16, D=32, O=4, tol=5e-3)
    # Batch x output-feature tiled MXU path (partial tiles on both axes).
    check(B=2600, D=64, O=300, tol=5e-3, o_tile=256)

    print("KERNEL_OK")
</pallas_src>

<mosaic_0001>
module attributes {stable_mosaic.version = 11 : i64} {
  func.func @_o1_vpu_kernel(%arg0: memref<8x32xf32, #tpu.memory_space<vmem>>, %arg1: memref<1x32xf32, #tpu.memory_space<vmem>>, %arg2: memref<1x1xf32, #tpu.memory_space<smem>>, %arg3: memref<8x1xf32, #tpu.memory_space<vmem>>) attributes {dimension_semantics = [], scalar_prefetch = 0 : i64, scratch_operands = 0 : i64, tpu.core_type = #tpu.core_type<tc>} {
    %c0 = arith.constant 0 : index
    %c0_0 = arith.constant 0 : index
    %0 = vector.load %arg0[%c0, %c0_0] : memref<8x32xf32, #tpu.memory_space<vmem>>, vector<8x32xf32>
    %c0_1 = arith.constant 0 : index
    %c0_2 = arith.constant 0 : index
    %1 = vector.load %arg1[%c0_1, %c0_2] : memref<1x32xf32, #tpu.memory_space<vmem>>, vector<1x32xf32>
    %2 = vector.broadcast %1 : vector<1x32xf32> to vector<8x32xf32>
    %3 = arith.mulf %0, %2 : vector<8x32xf32>
    %cst = arith.constant dense<0.000000e+00> : vector<8xf32>
    %4 = vector.multi_reduction <add>, %3, %cst [1] : vector<8x32xf32> to vector<8xf32>
    %5 = vector.shape_cast %4 : vector<8xf32> to vector<8x1xf32>
    %c0_3 = arith.constant 0 : index
    %c0_4 = arith.constant 0 : index
    %6 = memref.load %arg2[%c0_3, %c0_4] : memref<1x1xf32, #tpu.memory_space<smem>>
    %7 = vector.broadcast %6 : f32 to vector<8x1xf32>
    %8 = arith.addf %5, %7 : vector<8x1xf32>
    %c0_5 = arith.constant 0 : index
    %c0_6 = arith.constant 0 : index
    %9 = vector.load %arg3[%c0_5, %c0_6] : memref<8x1xf32, #tpu.memory_space<vmem>>, vector<8x1xf32>
    tpu.vector_store %arg3[%c0_5, %c0_6], %8 {strides = array<i32>} : memref<8x1xf32, #tpu.memory_space<vmem>>, vector<8x1xf32>,
    return
  }
}

</mosaic_0001>

<llo_original>
// kernel: tpu_custom_call.1
$region0: #{tpu_custom_call.1}
  #allocation0 [shape = 'u32[]', space=smem, size = 0x4, offset = 0x4, fixed_abs, tag = 'smem constant byte address 0x4 - core index']
  #allocation1 [shape = 'u32[144,128]{1,0:T(1,128)}', space=vmem, size = 0x12000, scoped, tag = 'internal scratch']
  #allocation2 [shape = 'f32[1,1]{1,0:T(1,128)S(6)}', space=smem, size = 0x200, scoped, tag = 'scoped memory for tpu_custom_call.1']
  %s0 = inlined_call_operand.hbm [shape: f32[8,32], index: 0, kind: input, shape index: {}]
  %s1 = inlined_call_operand.vmem [shape: f32[1,32], index: 1, kind: input, shape index: {}]
  %s2 = inlined_call_operand.<no memory space> [shape: f32[1,1], index: 2, kind: input, shape index: {}]
  %s3 = inlined_call_operand.vmem [shape: f32[8,1], index: 3, kind: output, shape index: {}]
  %s4 = sld [smem:[#allocation0]]
  $region26: #{tpu_custom_call.1} parent=0
    _
  %s6 = ssub.s32 1, %s4
  %s7 = scalar_select 0, %s6, %s4
  %8 = sst [smem:[#allocation2]] %s2
  $region1: #{tpu_custom_call.1} parent=0
    #allocation3 [shape = 'u8[4096]{0}', space=vmem, size = 0x1000, scoped, tag = 'input window, operand 0, single buffered']
    #allocation4 [shape = 's32[1]{0}', space=sflag, size = 0x4, scoped, tag = 'scoped memory for tpu_custom_call.1']
    %9 = vsyncpa [#allocation4], 0
    // Predicated region
    $region2: #{tpu_custom_call.1} parent=1 // pred_check
      _
    $region3: #{tpu_custom_call.1} parent=1 // pred_check_branch
      %11 = sbr.rel (0) target = $region5
    $region4: #{tpu_custom_call.1} parent=1 // pred_region
      %s13 = ssub.s32 128, 128
      %14 = vsyncadd [#allocation4], %s13
      %s16 = sshll.u32 [#allocation3], 4
      %s17 = int_to_ptr.vmem [resolvable:$true] %s16
      %19 = dma.hbm_to_vmem [thread:$0]  %s0, 128, %s17, [#allocation4]
    $region5: #{tpu_custom_call.1} parent=1 // pred_fallthru
      _
    // Predicated region
    $region6: #{tpu_custom_call.1} parent=1 // pred_check
      _
    $region7: #{tpu_custom_call.1} parent=1 // pred_check_branch
      %21 = sbr.rel (0) target = $region9
    $region8: #{tpu_custom_call.1} parent=1 // pred_region
      _
    $region9: #{tpu_custom_call.1} parent=1 // pred_fallthru
      _
    // Predicated region
    $region10: #{tpu_custom_call.1} parent=1 // pred_check
      _
    $region11: #{tpu_custom_call.1} parent=1 // pred_check_branch
      %23 = sbr.rel (0) target = $region13
    $region12: #{tpu_custom_call.1} parent=1 // pred_region
      _
    $region13: #{tpu_custom_call.1} parent=1 // pred_fallthru
      _
    // Predicated region
    $region14: #{tpu_custom_call.1} parent=1 // pred_check
      _
    $region15: #{tpu_custom_call.1} parent=1 // pred_check_branch
      %25 = sbr.rel (0) target = $region17
    $region16: #{tpu_custom_call.1} parent=1 // pred_region
      %26 = dma.done [#allocation4], 128
    $region17: #{tpu_custom_call.1} parent=1 // pred_fallthru
      _
    %v27 = vld [vmem:[#allocation3] sm:$0xff]
    %v28 = vld [vmem:[%s1] sm:$0x1]
    %v30 = vlaneseq
    %v31 = vshrl.u32 %v30, 7
    %v32 = vsub.s32 0, %v31
    %v33 = vrot.slane %v28, %v32
    %v35 = vmul.f32 %v27, %v33
    %vm36 = vcmask 261120
    %v37 = vsel %vm36, %v35, 0.0
    %38 = vadd.xlane.f32.xlu0 %v37
    %v39 = vpop.xlane.xlu0 %38
    %s40 = sld [smem:[#allocation2]]
    %v41 = vstv %s40
    %v42 = vadd.f32 %v39, %v41
    %vm43 = vcmask 7168
    %44 = vst.msk [vmem:[%s3] sm:$0xff] %vm43, %v42
    // Predicated region
    $region18: #{tpu_custom_call.1} parent=1 // pred_check
      _
    $region19: #{tpu_custom_call.1} parent=1 // pred_check_branch
      %46 = sbr.rel (0) target = $region21
    $region20: #{tpu_custom_call.1} parent=1 // pred_region
      _
    $region21: #{tpu_custom_call.1} parent=1 // pred_fallthru
      _
    // Predicated region
    $region22: #{tpu_custom_call.1} parent=1 // pred_check
      _
    $region23: #{tpu_custom_call.1} parent=1 // pred_check_branch
      %48 = sbr.rel (0) target = $region25
    $region24: #{tpu_custom_call.1} parent=1 // pred_region
      _
    $region25: #{tpu_custom_call.1} parent=1 // pred_fallthru
      _
    %49 = vsyncpa [#allocation4], 1

</llo_original>
